<compile_context>
chip_gen: v7x
topology: tpu7x:2x2x1
jax: 0.10.0
libtpu: 0.0.40
codegen_flags: <defaults>
</compile_context>

<pallas_src>
import functools

import jax
import jax.numpy as jnp
from jax.experimental import pallas as pl
from jax.experimental.pallas import tpu as pltpu

# ----------------------------- small config ---------------------------------
B = 2          # batch
NCAM = 2       # cameras (orig 6)
CIN = 3        # image channels
H, W = 8, 16   # image-feature spatial (orig 32 x 88)
HW = H * W     # 128  (lane axis inside the kernel)
CFEAT = 32     # image feature channels (orig 256 -> 80)
CBEV = 16      # downsampled image-BEV channels (orig 80)
CPTS = 16      # lidar BEV channels
CFUSE = 64     # fused channels (orig 512)
X, Y = 8, 16   # BEV grid (orig 180 x 180); X*Y == HW (image plane reused)
Q = X * Y      # queries (orig 200) == 128
NPTS = 64      # lidar points per sample
NCLS = 10      # heatmap classes
NHEAD = 2 + 1 + 3 + 2 + 2 + NCLS   # 20 head channels
NHEAD_PAD = 24                     # pad head rows to a sublane multiple

# packed-weight slab row offsets (all sublane-aligned multiples of 8)
R_B = 0                      # backbone conv   (CFEAT, CIN+1)
R_D = R_B + CFEAT            # 32  downsample  (CBEV, CFEAT+1)
R_P = R_D + CBEV             # 48  lidar proj  (CPTS, 4+1)
R_F = R_P + CPTS             # 64  fusion      (CFUSE, CBEV+CPTS+1)
R_H = R_F + CFUSE            # 128 head        (NHEAD_PAD, CFUSE+1)
WROWS = R_H + NHEAD_PAD      # 152
WCOLS = 128                  # lane-dense weight slab


# --------------------------- fused Pallas kernel ------------------------------
def _fused_kernel(imgs_ref, pts_ref, flat_ref, w_ref, o_ref):
    """End-to-end dense chain for one lane-slab (L = HW or B*HW).

    imgs_ref: (1, CIN+1, NCAM*L)  image channels + a ones channel (bias row)
    pts_ref : (1, 4, P)           point features, channels-first
    flat_ref: (1, P, 1)           int32 flat BEV-cell index per point
    w_ref   : (WROWS, WCOLS)      packed augmented weights (bias = last column)
    o_ref   : (1, NHEAD_PAD, L)   head output
    """
    L = o_ref.shape[-1]
    P = pts_ref.shape[-1]

    W_all = w_ref[...]                                   # (152, 128) resident
    ones_row = jnp.ones((1, L), jnp.float32)

    # ---- img backbone: ONE MXU matmul over all cameras, bias folded in ----
    wb = W_all[R_B:R_B + CFEAT, 0:CIN + 1]               # (32, 4)
    feats = jnp.maximum(
        jnp.dot(wb, imgs_ref[0], preferred_element_type=jnp.float32), 0.0)
    # feats: (CFEAT, NCAM*L)

    # ---- vtransform lift + bev_pool: depth softmax sums to 1, so the pooled
    # frustum reduces to a plain sum over cameras (dead depth work removed).
    # TODO(synk): real bev_pool scatters per-depth frustum features onto the
    # BEV grid using camera geometry; here the image plane doubles as the grid.
    pooled = feats[:, 0:L]
    for n in range(1, NCAM):                             # static unroll, NCAM=2
        pooled = pooled + feats[:, n * L:(n + 1) * L]    # (CFEAT, L)

    # ---- vtransform downsample: CFEAT -> CBEV (bias via augmented ones row) --
    wd = W_all[R_D:R_D + CBEV, 0:CFEAT + 1]              # (16, 33)
    img_bev = jnp.maximum(
        jnp.dot(wd, jnp.concatenate([pooled, ones_row], axis=0),
                preferred_element_type=jnp.float32), 0.0)          # (16, L)

    # ---- lidar voxelize (histogram scatter) as a one-hot MXU matmul ---------
    # TODO(synk): real voxelization + spconv sparse lidar backbone have no
    # clean dense Pallas equivalent; a dense one-hot contraction stands in.
    onehot = jnp.where(
        jax.lax.broadcasted_iota(jnp.int32, (P, L), 1) == flat_ref[0],
        1.0, 0.0).astype(jnp.float32)                               # (P, L)
    pts_grid = jnp.dot(pts_ref[0], onehot,
                       preferred_element_type=jnp.float32)          # (4, L)

    # ---- lidar feature projection: 4 -> CPTS --------------------------------
    wp = W_all[R_P:R_P + CPTS, 0:4 + 1]                  # (16, 5)
    pts_bev = jnp.maximum(
        jnp.dot(wp, jnp.concatenate([pts_grid, ones_row], axis=0),
                preferred_element_type=jnp.float32), 0.0)           # (16, L)

    # ---- fusion: single matmul over the stacked [img_bev; pts_bev; 1] slab --
    wf = W_all[R_F:R_F + CFUSE, 0:CBEV + CPTS + 1]       # (64, 33)
    fused = jnp.maximum(
        jnp.dot(wf, jnp.concatenate([img_bev, pts_bev, ones_row], axis=0),
                preferred_element_type=jnp.float32), 0.0)           # (64, L)

    # ---- head: CFUSE -> NHEAD_PAD (reg/height/dim/rot/vel/heatmap) ----------
    wh = W_all[R_H:R_H + NHEAD_PAD, 0:CFUSE + 1]         # (24, 65)
    o_ref[0] = jnp.dot(wh, jnp.concatenate([fused, ones_row], axis=0),
                       preferred_element_type=jnp.float32)          # (24, L)


# ------------------------------ parameters -----------------------------------
def init_params(key):
    ks = jax.random.split(key, 6)
    p = {}
    p["w_backbone"] = 0.2 * jax.random.normal(ks[0], (CIN, CFEAT), jnp.float32)
    p["b_backbone"] = jnp.zeros((CFEAT,), jnp.float32)
    p["w_down"] = 0.1 * jax.random.normal(ks[1], (CFEAT, CBEV), jnp.float32)
    p["b_down"] = jnp.zeros((CBEV,), jnp.float32)
    p["w_pts"] = 0.1 * jax.random.normal(ks[2], (4, CPTS), jnp.float32)
    p["b_pts"] = jnp.zeros((CPTS,), jnp.float32)
    p["w_fuse"] = 0.1 * jax.random.normal(ks[3], (CBEV + CPTS, CFUSE), jnp.float32)
    p["b_fuse"] = jnp.zeros((CFUSE,), jnp.float32)
    p["w_head"] = 0.1 * jax.random.normal(ks[4], (CFUSE, NHEAD), jnp.float32)
    p["b_head"] = jnp.zeros((NHEAD,), jnp.float32)
    return p


def pack_weights(p):
    """Pack all weights+biases into one lane-dense (WROWS, 128) slab.

    Each block is the transposed weight with the bias appended as an extra
    column (augmented matmul: the activation carries a matching ones row).
    """
    def padded(w, rows):
        out = jnp.zeros((rows, WCOLS), jnp.float32)
        return out.at[:w.shape[0], :w.shape[1]].set(w)

    wb = jnp.concatenate([p["w_backbone"].T, p["b_backbone"][:, None]], axis=1)
    wd = jnp.concatenate([p["w_down"].T, p["b_down"][:, None]], axis=1)
    wp = jnp.concatenate([p["w_pts"].T, p["b_pts"][:, None]], axis=1)
    wf = jnp.concatenate([p["w_fuse"].T, p["b_fuse"][:, None]], axis=1)
    wh = jnp.concatenate([p["w_head"].T, p["b_head"][:, None]], axis=1)
    return jnp.concatenate(
        [padded(wb, CFEAT), padded(wd, CBEV), padded(wp, CPTS),
         padded(wf, CFUSE), padded(wh, NHEAD_PAD)], axis=0)   # (152, 128)


# ------------------------------ glue / forward --------------------------------
@functools.partial(jax.jit, static_argnames=("fold_batch",))
def bevfusion_forward(imgs, points, wpack, fold_batch=True):
    """imgs: (B, NCAM, CIN, H, W); points: (B, NPTS, 4); wpack: (WROWS, 128)."""
    # ---- layout plumbing (tiny XLA ops): channels-first, lane-dense slabs ----
    imgs_r = imgs.reshape(B, NCAM, CIN, HW)
    imgs_aug = jnp.concatenate(
        [imgs_r, jnp.ones((B, NCAM, 1, HW), jnp.float32)], axis=2)  # +ones chan

    # flat BEV-cell index per lidar point (histogram scatter target)
    xs, ys = points[..., 0], points[..., 1]
    vx = jnp.clip(jnp.floor((xs + 1.0) * (X / 2.0)), 0, X - 1).astype(jnp.int32)
    vy = jnp.clip(jnp.floor((ys + 1.0) * (Y / 2.0)), 0, Y - 1).astype(jnp.int32)
    flat = vx * Y + vy                                     # (B, NPTS) int32
    ptsT = jnp.transpose(points, (0, 2, 1))                # (B, 4, NPTS)

    if fold_batch:
        # single grid step; lane axis carries (batch, hw) -> N=256 matmuls
        L = B * HW
        P = B * NPTS
        n_blk = 1
        imgs_k = jnp.transpose(imgs_aug, (2, 1, 0, 3)).reshape(1, CIN + 1,
                                                               NCAM * L)
        ptsT_k = jnp.transpose(ptsT, (1, 0, 2)).reshape(1, 4, P)
        boff = (jnp.arange(B, dtype=jnp.int32) * Q)[:, None]        # (B, 1)
        flat_k = (flat + boff).reshape(1, P, 1)
    else:
        # grid=(B,) "parallel": shard the batch across the two v7x TensorCores
        L = HW
        P = NPTS
        n_blk = B
        imgs_k = jnp.transpose(imgs_aug, (0, 2, 1, 3)).reshape(B, CIN + 1,
                                                               NCAM * L)
        ptsT_k = ptsT
        flat_k = flat.reshape(B, NPTS, 1)

    head = pl.pallas_call(
        _fused_kernel,
        out_shape=jax.ShapeDtypeStruct((n_blk, NHEAD_PAD, L), jnp.float32),
        grid_spec=pltpu.PrefetchScalarGridSpec(
            num_scalar_prefetch=0,
            grid=(n_blk,),
            in_specs=[
                pl.BlockSpec((1, CIN + 1, NCAM * L), lambda b: (b, 0, 0)),
                pl.BlockSpec((1, 4, P), lambda b: (b, 0, 0)),
                pl.BlockSpec((1, P, 1), lambda b: (b, 0, 0)),
                pl.BlockSpec((WROWS, WCOLS), lambda b: (0, 0)),
            ],
            out_specs=pl.BlockSpec((1, NHEAD_PAD, L), lambda b: (b, 0, 0)),
        ),
        compiler_params=pltpu.CompilerParams(
            dimension_semantics=("parallel",)),
    )(imgs_k, ptsT_k, flat_k, wpack)

    if fold_batch:
        head = head.reshape(NHEAD_PAD, B, Q).transpose(1, 0, 2)     # (B, 24, Q)
    head = head[:, :NHEAD, :]                                       # (B, 20, Q)

    reg = head[:, 0:2]          # (B, 2, Q)
    height = head[:, 2:3]       # (B, 1, Q)
    dim_ = head[:, 3:6]         # (B, 3, Q)
    rot = head[:, 6:8]          # (B, 2, Q)
    vel = head[:, 8:10]         # (B, 2, Q)
    heatmap = head[:, 10:20]    # (B, 10, Q)
    score = jax.nn.sigmoid(heatmap)
    query_label = jnp.argmax(heatmap, axis=1).astype(jnp.float32)   # (B, Q)

    # ---- decode (glue; original utils.decode does top-k box decoding) ----
    bbox_feat = jnp.concatenate([reg, height, dim_, rot, vel], axis=1)  # (B,10,Q)
    bboxes_3d = jnp.transpose(bbox_feat, (0, 2, 1))        # (B, Q, 10)
    scores_3d = jnp.max(score, axis=1)                     # (B, Q)
    labels_3d = query_label                                # (B, Q)
    return bboxes_3d, scores_3d, labels_3d


def _is_dual_tensorcore():
    """v7x has 2 TensorCores/chip: keep grid=(B,) parallel there; otherwise
    fold the batch into the lane axis (single grid step, 256-lane matmuls)."""
    try:
        kind = jax.devices()[0].device_kind.lower()
        return ("v7" in kind) or ("tpu7" in kind)
    except Exception:
        return False


# ---------------------------------- main --------------------------------------
if __name__ == "__main__":
    key = jax.random.PRNGKey(0)
    k_img, k_pts, k_par = jax.random.split(key, 3)

    imgs = jax.random.normal(k_img, (B, NCAM, CIN, H, W), jnp.float32)
    points = jax.random.uniform(k_pts, (B, NPTS, 4), jnp.float32,
                                minval=-1.0, maxval=1.0)
    params = init_params(k_par)
    wpack = pack_weights(params)          # packed once, outside the jit

    fold = not _is_dual_tensorcore()
    bboxes, scores, labels = bevfusion_forward(imgs, points, wpack,
                                               fold_batch=fold)
    jax.block_until_ready((bboxes, scores, labels))

    assert bboxes.shape == (B, Q, 10)
    assert scores.shape == (B, Q)
    assert labels.shape == (B, Q)
    print("KERNEL_OK")
</pallas_src>

<mosaic_0001>
module attributes {stable_mosaic.version = 11 : i64} {
  func.func @_fused_kernel(%arg0: i32, %arg1: memref<1x4x512xf32, #tpu.memory_space<vmem>>, %arg2: memref<1x4x128xf32, #tpu.memory_space<vmem>>, %arg3: memref<1x128x1xi32, #tpu.memory_space<vmem>>, %arg4: memref<152x128xf32, #tpu.memory_space<vmem>>, %arg5: memref<1x24x256xf32, #tpu.memory_space<vmem>>) attributes {dimension_semantics = [#tpu.dimension_semantics<parallel>], iteration_bounds = array<i64: 1>, scalar_prefetch = 0 : i64, scratch_operands = 0 : i64, tpu.core_type = #tpu.core_type<tc>, window_params = [{transform_indices = @transform_0, window_bounds = array<i64: 1, 4, 512>}, {transform_indices = @transform_1, window_bounds = array<i64: 1, 4, 128>}, {transform_indices = @transform_2, window_bounds = array<i64: 1, 128, 1>}, {pipeline_mode = #tpu.pipeline_mode<synchronous>, transform_indices = @transform_3, window_bounds = array<i64: 152, 128>}, {transform_indices = @transform_4, window_bounds = array<i64: 1, 24, 256>}]} {
    %c0 = arith.constant 0 : index
    %c0_0 = arith.constant 0 : index
    %0 = vector.load %arg4[%c0, %c0_0] : memref<152x128xf32, #tpu.memory_space<vmem>>, vector<152x128xf32>
    %cst = arith.constant 1.000000e+00 : f32
    %1 = vector.broadcast %cst : f32 to vector<1x256xf32>
    %2 = vector.extract_strided_slice %0 {offsets = [0, 0], sizes = [32, 4], strides = [1, 1]} : vector<152x128xf32> to vector<32x4xf32>
    %c0_1 = arith.constant 0 : index
    %c0_2 = arith.constant 0 : index
    %c0_3 = arith.constant 0 : index
    %3 = vector.load %arg1[%c0_1, %c0_2, %c0_3] : memref<1x4x512xf32, #tpu.memory_space<vmem>>, vector<1x4x512xf32>
    %4 = vector.shape_cast %3 : vector<1x4x512xf32> to vector<4x512xf32>
    %cst_4 = arith.constant dense<0.000000e+00> : vector<32x512xf32>
    %5 = tpu.matmul %2, %4, %cst_4 {dimension_numbers = #tpu.dot_dimension_numbers<[1], [0], [0], [1], [0, 0, 1, 1], [], []>} : vector<32x4xf32>, vector<4x512xf32>, vector<32x512xf32> -> vector<32x512xf32>
    %cst_5 = arith.constant 0.000000e+00 : f32
    %6 = vector.broadcast %cst_5 : f32 to vector<32x512xf32>
    %7 = arith.maximumf %5, %6 : vector<32x512xf32>
    %8 = vector.extract_strided_slice %7 {offsets = [0, 0], sizes = [32, 256], strides = [1, 1]} : vector<32x512xf32> to vector<32x256xf32>
    %9 = vector.extract_strided_slice %7 {offsets = [0, 256], sizes = [32, 256], strides = [1, 1]} : vector<32x512xf32> to vector<32x256xf32>
    %10 = arith.addf %8, %9 : vector<32x256xf32>
    %11 = vector.extract_strided_slice %0 {offsets = [32, 0], sizes = [16, 33], strides = [1, 1]} : vector<152x128xf32> to vector<16x33xf32>
    %12 = tpu.concatenate %10, %1 in 0 : vector<32x256xf32>, vector<1x256xf32> -> vector<33x256xf32>
    %cst_6 = arith.constant dense<0.000000e+00> : vector<16x256xf32>
    %13 = tpu.matmul %11, %12, %cst_6 {dimension_numbers = #tpu.dot_dimension_numbers<[1], [0], [0], [1], [0, 0, 1, 1], [], []>} : vector<16x33xf32>, vector<33x256xf32>, vector<16x256xf32> -> vector<16x256xf32>
    %cst_7 = arith.constant 0.000000e+00 : f32
    %14 = vector.broadcast %cst_7 : f32 to vector<16x256xf32>
    %15 = arith.maximumf %13, %14 : vector<16x256xf32>
    %16 = tpu.iota {dimensions = array<i32: 1>} : vector<128x256xi32>
    %c0_8 = arith.constant 0 : index
    %c0_9 = arith.constant 0 : index
    %c0_10 = arith.constant 0 : index
    %17 = vector.load %arg3[%c0_8, %c0_9, %c0_10] : memref<1x128x1xi32, #tpu.memory_space<vmem>>, vector<1x128x1xi32>
    %18 = vector.shape_cast %17 : vector<1x128x1xi32> to vector<128x1xi32>
    %19 = vector.broadcast %18 : vector<128x1xi32> to vector<128x256xi32>
    %20 = arith.cmpi eq, %16, %19 : vector<128x256xi32>
    %cst_11 = arith.constant 1.000000e+00 : f32
    %cst_12 = arith.constant 0.000000e+00 : f32
    %21 = vector.broadcast %cst_11 : f32 to vector<128x256xf32>
    %22 = vector.broadcast %cst_12 : f32 to vector<128x256xf32>
    %23 = arith.select %20, %21, %22 : vector<128x256xi1>, vector<128x256xf32>
    %c0_13 = arith.constant 0 : index
    %c0_14 = arith.constant 0 : index
    %c0_15 = arith.constant 0 : index
    %24 = vector.load %arg2[%c0_13, %c0_14, %c0_15] : memref<1x4x128xf32, #tpu.memory_space<vmem>>, vector<1x4x128xf32>
    %25 = vector.shape_cast %24 : vector<1x4x128xf32> to vector<4x128xf32>
    %cst_16 = arith.constant dense<0.000000e+00> : vector<4x256xf32>
    %26 = tpu.matmul %25, %23, %cst_16 {dimension_numbers = #tpu.dot_dimension_numbers<[1], [0], [0], [1], [0, 0, 1, 1], [], []>} : vector<4x128xf32>, vector<128x256xf32>, vector<4x256xf32> -> vector<4x256xf32>
    %27 = vector.extract_strided_slice %0 {offsets = [48, 0], sizes = [16, 5], strides = [1, 1]} : vector<152x128xf32> to vector<16x5xf32>
    %28 = tpu.concatenate %26, %1 in 0 : vector<4x256xf32>, vector<1x256xf32> -> vector<5x256xf32>
    %cst_17 = arith.constant dense<0.000000e+00> : vector<16x256xf32>
    %29 = tpu.matmul %27, %28, %cst_17 {dimension_numbers = #tpu.dot_dimension_numbers<[1], [0], [0], [1], [0, 0, 1, 1], [], []>} : vector<16x5xf32>, vector<5x256xf32>, vector<16x256xf32> -> vector<16x256xf32>
    %cst_18 = arith.constant 0.000000e+00 : f32
    %30 = vector.broadcast %cst_18 : f32 to vector<16x256xf32>
    %31 = arith.maximumf %29, %30 : vector<16x256xf32>
    %32 = vector.extract_strided_slice %0 {offsets = [64, 0], sizes = [64, 33], strides = [1, 1]} : vector<152x128xf32> to vector<64x33xf32>
    %33 = tpu.concatenate %15, %31, %1 in 0 : vector<16x256xf32>, vector<16x256xf32>, vector<1x256xf32> -> vector<33x256xf32>
    %cst_19 = arith.constant dense<0.000000e+00> : vector<64x256xf32>
    %34 = tpu.matmul %32, %33, %cst_19 {dimension_numbers = #tpu.dot_dimension_numbers<[1], [0], [0], [1], [0, 0, 1, 1], [], []>} : vector<64x33xf32>, vector<33x256xf32>, vector<64x256xf32> -> vector<64x256xf32>
    %cst_20 = arith.constant 0.000000e+00 : f32
    %35 = vector.broadcast %cst_20 : f32 to vector<64x256xf32>
    %36 = arith.maximumf %34, %35 : vector<64x256xf32>
    %37 = vector.extract_strided_slice %0 {offsets = [128, 0], sizes = [24, 65], strides = [1, 1]} : vector<152x128xf32> to vector<24x65xf32>
    %38 = tpu.concatenate %36, %1 in 0 : vector<64x256xf32>, vector<1x256xf32> -> vector<65x256xf32>
    %cst_21 = arith.constant dense<0.000000e+00> : vector<24x256xf32>
    %39 = tpu.matmul %37, %38, %cst_21 {dimension_numbers = #tpu.dot_dimension_numbers<[1], [0], [0], [1], [0, 0, 1, 1], [], []>} : vector<24x65xf32>, vector<65x256xf32>, vector<24x256xf32> -> vector<24x256xf32>
    %c0_22 = arith.constant 0 : index
    %c0_23 = arith.constant 0 : index
    %c0_24 = arith.constant 0 : index
    %40 = vector.load %arg5[%c0_22, %c0_23, %c0_24] : memref<1x24x256xf32, #tpu.memory_space<vmem>>, vector<1x24x256xf32>
    %41 = vector.shape_cast %40 : vector<1x24x256xf32> to vector<24x256xf32>
    %42 = vector.shape_cast %39 : vector<24x256xf32> to vector<1x24x256xf32>
    tpu.vector_store %arg5[%c0_22, %c0_23, %c0_24], %42 {strides = array<i32>} : memref<1x24x256xf32, #tpu.memory_space<vmem>>, vector<1x24x256xf32>,
    return
  }
  func.func @transform_0(%arg0: i32) -> (i32, i32, i32) {
    %c0_i32 = arith.constant 0 : i32
    %c0_i32_0 = arith.constant 0 : i32
    %c0_i32_1 = arith.constant 0 : i32
    return %arg0, %c0_i32, %c0_i32_0 : i32, i32, i32
  }
  func.func @transform_1(%arg0: i32) -> (i32, i32, i32) {
    %c0_i32 = arith.constant 0 : i32
    %c0_i32_0 = arith.constant 0 : i32
    %c0_i32_1 = arith.constant 0 : i32
    return %arg0, %c0_i32, %c0_i32_0 : i32, i32, i32
  }
  func.func @transform_2(%arg0: i32) -> (i32, i32, i32) {
    %c0_i32 = arith.constant 0 : i32
    %c0_i32_0 = arith.constant 0 : i32
    %c0_i32_1 = arith.constant 0 : i32
    return %arg0, %c0_i32, %c0_i32_0 : i32, i32, i32
  }
  func.func @transform_3(%arg0: i32) -> (i32, i32) {
    %c0_i32 = arith.constant 0 : i32
    %c0_i32_0 = arith.constant 0 : i32
    %c0_i32_1 = arith.constant 0 : i32
    return %c0_i32, %c0_i32_0 : i32, i32
  }
  func.func @transform_4(%arg0: i32) -> (i32, i32, i32) {
    %c0_i32 = arith.constant 0 : i32
    %c0_i32_0 = arith.constant 0 : i32
    %c0_i32_1 = arith.constant 0 : i32
    return %arg0, %c0_i32, %c0_i32_0 : i32, i32, i32
  }
}

</mosaic_0001>

<llo_original>
// kernel: bevfusion_forward.1
$region0: #{bevfusion_forward.1}
  #allocation0 [shape = 'u32[]', space=smem, size = 0x4, offset = 0x4, fixed_abs, tag = 'smem constant byte address 0x4 - core index']
  #allocation1 [shape = 'u32[144,128]{1,0:T(1,128)}', space=vmem, size = 0x12000, scoped, tag = 'internal scratch']
  %s0 = inlined_call_operand.vmem [shape: f32[1,4,512], index: 0, kind: input, shape index: {}]
  %s1 = inlined_call_operand.vmem [shape: f32[1,4,128], index: 1, kind: input, shape index: {}]
  %s2 = inlined_call_operand.vmem [shape: s32[1,128,1], index: 2, kind: input, shape index: {}]
  %s3 = inlined_call_operand.vmem [shape: f32[152,128], index: 3, kind: input, shape index: {}]
  %s4 = inlined_call_operand.vmem [shape: f32[1,24,256], index: 4, kind: output, shape index: {}]
  %s5 = sld [smem:[#allocation0]]
  $region26: #{bevfusion_forward.1} parent=0
    _
  %s7 = ssub.s32 1, %s5
  %s8 = scalar_select 0, %s7, %s5
  // Predicated region
  $region2: #{bevfusion_forward.1} parent=0 // pred_check
    _
  $region3: #{bevfusion_forward.1} parent=0 // pred_check_branch
    %10 = sbr.rel (0) target = $region5
  $region4: #{bevfusion_forward.1} parent=0 // pred_region
    _
  $region5: #{bevfusion_forward.1} parent=0 // pred_fallthru
    _
  // Predicated region
  $region6: #{bevfusion_forward.1} parent=0 // pred_check
    _
  $region7: #{bevfusion_forward.1} parent=0 // pred_check_branch
    %12 = sbr.rel (0) target = $region9
  $region8: #{bevfusion_forward.1} parent=0 // pred_region
    _
  $region9: #{bevfusion_forward.1} parent=0 // pred_fallthru
    _
  // Predicated region
  $region10: #{bevfusion_forward.1} parent=0 // pred_check
    _
  $region11: #{bevfusion_forward.1} parent=0 // pred_check_branch
    %14 = sbr.rel (0) target = $region13
  $region12: #{bevfusion_forward.1} parent=0 // pred_region
    _
  $region13: #{bevfusion_forward.1} parent=0 // pred_fallthru
    _
  // Predicated region
  $region14: #{bevfusion_forward.1} parent=0 // pred_check
    _
  $region15: #{bevfusion_forward.1} parent=0 // pred_check_branch
    %16 = sbr.rel (0) target = $region17
  $region16: #{bevfusion_forward.1} parent=0 // pred_region
    _
  $region17: #{bevfusion_forward.1} parent=0 // pred_fallthru
    _
  %v17 = vld [vmem:[%s3] sm:$0xff]
  %v18 = vld [vmem:[%s3 + $0x8] sm:$0xff]
  %v19 = vld [vmem:[%s3 + $0x10] sm:$0xff]
  %v20 = vld [vmem:[%s3 + $0x18] sm:$0xff]
  %v21 = vld [vmem:[%s3 + $0x20] sm:$0xff]
  %v22 = vld [vmem:[%s3 + $0x28] sm:$0xff]
  %v23 = vld [vmem:[%s3 + $0x30] sm:$0xff]
  %v24 = vld [vmem:[%s3 + $0x38] sm:$0xff]
  %v25 = vld [vmem:[%s3 + $0x40] sm:$0xff]
  %v26 = vld [vmem:[%s3 + $0x48] sm:$0xff]
  %v27 = vld [vmem:[%s3 + $0x50] sm:$0xff]
  %v28 = vld [vmem:[%s3 + $0x58] sm:$0xff]
  %v29 = vld [vmem:[%s3 + $0x60] sm:$0xff]
  %v30 = vld [vmem:[%s3 + $0x68] sm:$0xff]
  %v31 = vld [vmem:[%s3 + $0x70] sm:$0xff]
  %v32 = vld [vmem:[%s3 + $0x78] sm:$0xff]
  %v33 = vld [vmem:[%s3 + $0x80] sm:$0xff]
  %v34 = vld [vmem:[%s3 + $0x88] sm:$0xff]
  %v35 = vld [vmem:[%s3 + $0x90] sm:$0xff]
  %v36 = vld [vmem:[%s0] sm:$0xff]
  %v37 = vld [vmem:[%s0 + $0x8] sm:$0xff]
  %v40 = vcombine.high %v36, %v36
  %v41 = vcombine.high %v37, %v37
  %vm42 = vcmask 31744
  %v44 = vsel %vm42, %v17, 0
  %v47 = vsel %vm42, %v18, 0
  %v50 = vsel %vm42, %v19, 0
  %v53 = vsel %vm42, %v20, 0
  %vm55 = vcmask 1043456
  %v56 = vsel %vm55, %v36, 0
  %v58 = vsel %vm55, %v40, 0
  %v60 = vsel %vm55, %v37, 0
  %v62 = vsel %vm55, %v41, 0
  %64 = vmatprep.subr.mxu0 %v58
  %65 = vmatpush1.msra.mxu0 %v56
  %66 = vmatprep.subr.mxu0 0.0
  %67 = vmatpush1.msra.mxu0 0.0
  %68 = vmatprep.subr.mxu0 0.0
  %69 = vmatpush1.msra.mxu0 0.0
  %70 = vmatprep.subr.mxu0 0.0
  %71 = vmatpush1.msra.mxu0 0.0
  %72 = vmatprep.subr.mxu0 0.0
  %73 = vmatpush1.msra.mxu0 0.0
  %74 = vmatprep.subr.mxu0 0.0
  %75 = vmatpush1.msra.mxu0 0.0
  %76 = vmatprep.subr.mxu0 0.0
  %77 = vmatpush1.msra.mxu0 0.0
  %78 = vmatprep.subr.mxu0 0.0
  %79 = vmatpush1.msra.mxu0 0.0
  %80 = vmatprep.subr.mxu0 0.0
  %81 = vmatpush1.msra.mxu0 0.0
  %82 = vmatprep.subr.mxu0 0.0
  %83 = vmatpush1.msra.mxu0 0.0
  %84 = vmatprep.subr.mxu0 0.0
  %85 = vmatpush1.msra.mxu0 0.0
  %86 = vmatprep.subr.mxu0 0.0
  %87 = vmatpush1.msra.mxu0 0.0
  %88 = vmatprep.subr.mxu0 0.0
  %89 = vmatpush1.msra.mxu0 0.0
  %90 = vmatprep.subr.mxu0 0.0
  %91 = vmatpush1.msra.mxu0 0.0
  %92 = vmatprep.subr.mxu0 0.0
  %93 = vmatpush1.msra.mxu0 0.0
  %94 = vmatprep.subr.mxu0 0.0
  %95 = vmatpush1.msra.mxu0 0.0
  %96 = vmatprep.subr.mxu0 0.0
  %97 = vmatpush1.msra.mxu0 0.0
  %98 = vmatprep.subr.mxu0 0.0
  %99 = vmatpush1.msra.mxu0 0.0
  %100 = vmatprep.subr.mxu0 0.0
  %101 = vmatpush1.msra.mxu0 0.0
  %102 = vmatprep.subr.mxu0 0.0
  %103 = vmatpush1.msra.mxu0 0.0
  %104 = vmatprep.subr.mxu0 0.0
  %105 = vmatpush1.msra.mxu0 0.0
  %106 = vmatprep.subr.mxu0 0.0
  %107 = vmatpush1.msra.mxu0 0.0
  %108 = vmatprep.subr.mxu0 0.0
  %109 = vmatpush1.msra.mxu0 0.0
  %110 = vmatprep.subr.mxu0 0.0
  %111 = vmatpush1.msra.mxu0 0.0
  %112 = vmatprep.subr.mxu0 0.0
  %113 = vmatpush1.msra.mxu0 0.0
  %114 = vmatprep.subr.mxu0 0.0
  %115 = vmatpush1.msra.mxu0 0.0
  %116 = vmatprep.subr.mxu0 0.0
  %117 = vmatpush1.msra.mxu0 0.0
  %118 = vmatprep.subr.mxu0 0.0
  %119 = vmatpush1.msra.mxu0 0.0
  %120 = vmatprep.subr.mxu0 0.0
  %121 = vmatpush1.msra.mxu0 0.0
  %122 = vmatprep.subr.mxu0 0.0
  %123 = vmatpush1.msra.mxu0 0.0
  %124 = vmatprep.subr.mxu0 0.0
  %125 = vmatpush1.msra.mxu0 0.0
  %126 = vmatprep.subr.mxu0 0.0
  %127 = vmatpush1.msra.mxu0 0.0
  %128 = vmatprep.mubr.f32.mxu0 0.0
  %129 = vmatmul.mubr.f32.gmra.mrb[0].mxu0 %v44
  %v130 = vpop.f32.mrb[0].mxu0
  %v131 = vadd.f32 0.0, %v130
  %v132 = vpop.f32.mrb[0].mxu0
  %v133 = vadd.f32 0.0, %v132
  %134 = vmatprep.mubr.f32.mxu0 0.0
  %135 = vmatmul.mubr.f32.gmra.mrb[0].mxu0 %v47
  %v136 = vpop.f32.mrb[0].mxu0
  %v137 = vadd.f32 0.0, %v136
  %v138 = vpop.f32.mrb[0].mxu0
  %v139 = vadd.f32 0.0, %v138
  %140 = vmatprep.mubr.f32.mxu0 0.0
  %141 = vmatmul.mubr.f32.gmra.mrb[0].mxu0 %v50
  %v142 = vpop.f32.mrb[0].mxu0
  %v143 = vadd.f32 0.0, %v142
  %v144 = vpop.f32.mrb[0].mxu0
  %v145 = vadd.f32 0.0, %v144
  %146 = vmatprep.mubr.f32.mxu0 0.0
  %147 = vmatmul.mubr.f32.gmra.mrb[0].mxu0 %v53
  %v148 = vpop.f32.mrb[0].mxu0
  %v149 = vadd.f32 0.0, %v148
  %v150 = vpop.f32.mrb[0].mxu0
  %v151 = vadd.f32 0.0, %v150
  %152 = vdwg.mxu0
  %153 = vmatprep.subr.mxu0 %v62
  %154 = vmatpush1.msra.mxu0 %v60
  %155 = vmatprep.subr.mxu0 0.0
  %156 = vmatpush1.msra.mxu0 0.0
  %157 = vmatprep.subr.mxu0 0.0
  %158 = vmatpush1.msra.mxu0 0.0
  %159 = vmatprep.subr.mxu0 0.0
  %160 = vmatpush1.msra.mxu0 0.0
  %161 = vmatprep.subr.mxu0 0.0
  %162 = vmatpush1.msra.mxu0 0.0
  %163 = vmatprep.subr.mxu0 0.0
  %164 = vmatpush1.msra.mxu0 0.0
  %165 = vmatprep.subr.mxu0 0.0
  %166 = vmatpush1.msra.mxu0 0.0
  %167 = vmatprep.subr.mxu0 0.0
  %168 = vmatpush1.msra.mxu0 0.0
  %169 = vmatprep.subr.mxu0 0.0
  %170 = vmatpush1.msra.mxu0 0.0
  %171 = vmatprep.subr.mxu0 0.0
  %172 = vmatpush1.msra.mxu0 0.0
  %173 = vmatprep.subr.mxu0 0.0
  %174 = vmatpush1.msra.mxu0 0.0
  %175 = vmatprep.subr.mxu0 0.0
  %176 = vmatpush1.msra.mxu0 0.0
  %177 = vmatprep.subr.mxu0 0.0
  %178 = vmatpush1.msra.mxu0 0.0
  %179 = vmatprep.subr.mxu0 0.0
  %180 = vmatpush1.msra.mxu0 0.0
  %181 = vmatprep.subr.mxu0 0.0
  %182 = vmatpush1.msra.mxu0 0.0
  %183 = vmatprep.subr.mxu0 0.0
  %184 = vmatpush1.msra.mxu0 0.0
  %185 = vmatprep.subr.mxu0 0.0
  %186 = vmatpush1.msra.mxu0 0.0
  %187 = vmatprep.subr.mxu0 0.0
  %188 = vmatpush1.msra.mxu0 0.0
  %189 = vmatprep.subr.mxu0 0.0
  %190 = vmatpush1.msra.mxu0 0.0
  %191 = vmatprep.subr.mxu0 0.0
  %192 = vmatpush1.msra.mxu0 0.0
  %193 = vmatprep.subr.mxu0 0.0
  %194 = vmatpush1.msra.mxu0 0.0
  %195 = vmatprep.subr.mxu0 0.0
  %196 = vmatpush1.msra.mxu0 0.0
  %197 = vmatprep.subr.mxu0 0.0
  %198 = vmatpush1.msra.mxu0 0.0
  %199 = vmatprep.subr.mxu0 0.0
  %200 = vmatpush1.msra.mxu0 0.0
  %201 = vmatprep.subr.mxu0 0.0
  %202 = vmatpush1.msra.mxu0 0.0
  %203 = vmatprep.subr.mxu0 0.0
  %204 = vmatpush1.msra.mxu0 0.0
  %205 = vmatprep.subr.mxu0 0.0
  %206 = vmatpush1.msra.mxu0 0.0
  %207 = vmatprep.subr.mxu0 0.0
  %208 = vmatpush1.msra.mxu0 0.0
  %209 = vmatprep.subr.mxu0 0.0
  %210 = vmatpush1.msra.mxu0 0.0
  %211 = vmatprep.subr.mxu0 0.0
  %212 = vmatpush1.msra.mxu0 0.0
  %213 = vmatprep.subr.mxu0 0.0
  %214 = vmatpush1.msra.mxu0 0.0
  %215 = vmatprep.subr.mxu0 0.0
  %216 = vmatpush1.msra.mxu0 0.0
  %217 = vmatprep.mubr.f32.mxu0 0.0
  %218 = vmatmul.mubr.f32.gmra.mrb[0].mxu0 %v44
  %v219 = vpop.f32.mrb[0].mxu0
  %v220 = vadd.f32 0.0, %v219
  %v221 = vpop.f32.mrb[0].mxu0
  %v222 = vadd.f32 0.0, %v221
  %223 = vmatprep.mubr.f32.mxu0 0.0
  %224 = vmatmul.mubr.f32.gmra.mrb[0].mxu0 %v47
  %v225 = vpop.f32.mrb[0].mxu0
  %v226 = vadd.f32 0.0, %v225
  %v227 = vpop.f32.mrb[0].mxu0
  %v228 = vadd.f32 0.0, %v227
  %229 = vmatprep.mubr.f32.mxu0 0.0
  %230 = vmatmul.mubr.f32.gmra.mrb[0].mxu0 %v50
  %v231 = vpop.f32.mrb[0].mxu0
  %v232 = vadd.f32 0.0, %v231
  %v233 = vpop.f32.mrb[0].mxu0
  %v234 = vadd.f32 0.0, %v233
  %235 = vmatprep.mubr.f32.mxu0 0.0
  %236 = vmatmul.mubr.f32.gmra.mrb[0].mxu0 %v53
  %v237 = vpop.f32.mrb[0].mxu0
  %v238 = vadd.f32 0.0, %v237
  %v239 = vpop.f32.mrb[0].mxu0
  %v240 = vadd.f32 0.0, %v239
  %241 = vdwg.mxu0
  %v242 = vmax.f32 %v131, 0.0
  %v243 = vmax.f32 %v133, 0.0
  %v244 = vmax.f32 %v220, 0.0
  %v245 = vmax.f32 %v222, 0.0
  %v246 = vmax.f32 %v137, 0.0
  %v247 = vmax.f32 %v139, 0.0
  %v248 = vmax.f32 %v226, 0.0
  %v249 = vmax.f32 %v228, 0.0
  %v250 = vmax.f32 %v143, 0.0
  %v251 = vmax.f32 %v145, 0.0
  %v252 = vmax.f32 %v232, 0.0
  %v253 = vmax.f32 %v234, 0.0
  %v254 = vmax.f32 %v149, 0.0
  %v255 = vmax.f32 %v151, 0.0
  %v256 = vmax.f32 %v238, 0.0
  %v257 = vmax.f32 %v240, 0.0
  %v258 = vadd.f32 %v242, %v244
  %v259 = vadd.f32 %v243, %v245
  %v260 = vadd.f32 %v246, %v248
  %v261 = vadd.f32 %v247, %v249
  %v262 = vadd.f32 %v250, %v252
  %v263 = vadd.f32 %v251, %v253
  %v264 = vadd.f32 %v254, %v256
  %v265 = vadd.f32 %v255, %v257
  %vm266 = vcmask 269312
  %v268 = vsel %vm266, %v21, 0
  %v271 = vsel %vm266, %v22, 0
  %vm273 = vcmask 1040384
  %v275 = vsel %vm273, 1.0, 0
  %277 = vmatprep.subr.mxu0 %v259
  %278 = vmatpush1.msra.mxu0 %v258
  %279 = vmatprep.subr.mxu0 %v261
  %280 = vmatpush1.msra.mxu0 %v260
  %281 = vmatprep.subr.mxu0 %v263
  %282 = vmatpush1.msra.mxu0 %v262
  %283 = vmatprep.subr.mxu0 %v265
  %284 = vmatpush1.msra.mxu0 %v264
  %285 = vmatprep.subr.mxu0 %v275
  %286 = vmatpush1.msra.mxu0 %v275
  %287 = vmatprep.subr.mxu0 0.0
  %288 = vmatpush1.msra.mxu0 0.0
  %289 = vmatprep.subr.mxu0 0.0
  %290 = vmatpush1.msra.mxu0 0.0
  %291 = vmatprep.subr.mxu0 0.0
  %292 = vmatpush1.msra.mxu0 0.0
  %293 = vmatprep.subr.mxu0 0.0
  %294 = vmatpush1.msra.mxu0 0.0
  %295 = vmatprep.subr.mxu0 0.0
  %296 = vmatpush1.msra.mxu0 0.0
  %297 = vmatprep.subr.mxu0 0.0
  %298 = vmatpush1.msra.mxu0 0.0
  %299 = vmatprep.subr.mxu0 0.0
  %300 = vmatpush1.msra.mxu0 0.0
  %301 = vmatprep.subr.mxu0 0.0
  %302 = vmatpush1.msra.mxu0 0.0
  %303 = vmatprep.subr.mxu0 0.0
  %304 = vmatpush1.msra.mxu0 0.0
  %305 = vmatprep.subr.mxu0 0.0
  %306 = vmatpush1.msra.mxu0 0.0
  %307 = vmatprep.subr.mxu0 0.0
  %308 = vmatpush1.msra.mxu0 0.0
  %309 = vmatprep.subr.mxu0 0.0
  %310 = vmatpush1.msra.mxu0 0.0
  %311 = vmatprep.subr.mxu0 0.0
  %312 = vmatpush1.msra.mxu0 0.0
  %313 = vmatprep.subr.mxu0 0.0
  %314 = vmatpush1.msra.mxu0 0.0
  %315 = vmatprep.subr.mxu0 0.0
  %316 = vmatpush1.msra.mxu0 0.0
  %317 = vmatprep.subr.mxu0 0.0
  %318 = vmatpush1.msra.mxu0 0.0
  %319 = vmatprep.subr.mxu0 0.0
  %320 = vmatpush1.msra.mxu0 0.0
  %321 = vmatprep.subr.mxu0 0.0
  %322 = vmatpush1.msra.mxu0 0.0
  %323 = vmatprep.subr.mxu0 0.0
  %324 = vmatpush1.msra.mxu0 0.0
  %325 = vmatprep.subr.mxu0 0.0
  %326 = vmatpush1.msra.mxu0 0.0
  %327 = vmatprep.subr.mxu0 0.0
  %328 = vmatpush1.msra.mxu0 0.0
  %329 = vmatprep.subr.mxu0 0.0
  %330 = vmatpush1.msra.mxu0 0.0
  %331 = vmatprep.subr.mxu0 0.0
  %332 = vmatpush1.msra.mxu0 0.0
  %333 = vmatprep.subr.mxu0 0.0
  %334 = vmatpush1.msra.mxu0 0.0
  %335 = vmatprep.subr.mxu0 0.0
  %336 = vmatpush1.msra.mxu0 0.0
  %337 = vmatprep.subr.mxu0 0.0
  %338 = vmatpush1.msra.mxu0 0.0
  %339 = vmatprep.subr.mxu0 0.0
  %340 = vmatpush1.msra.mxu0 0.0
  %341 = vmatprep.mubr.f32.mxu0 0.0
  %342 = vmatmul.mubr.f32.gmra.mrb[0].mxu0 %v268
  %v343 = vpop.f32.mrb[0].mxu0
  %v344 = vadd.f32 0.0, %v343
  %v345 = vpop.f32.mrb[0].mxu0
  %v346 = vadd.f32 0.0, %v345
  %347 = vmatprep.mubr.f32.mxu0 0.0
  %348 = vmatmul.mubr.f32.gmra.mrb[0].mxu0 %v271
  %v349 = vpop.f32.mrb[0].mxu0
  %v350 = vadd.f32 0.0, %v349
  %v351 = vpop.f32.mrb[0].mxu0
  %v352 = vadd.f32 0.0, %v351
  %353 = vdwg.mxu0
  %v354 = vmax.f32 %v344, 0.0
  %v355 = vmax.f32 %v346, 0.0
  %v356 = vmax.f32 %v350, 0.0
  %v357 = vmax.f32 %v352, 0.0
  %v358 = vlaneseq
  %v359 = vand.u32 %v358, 127
  %v360 = vadd.s32 %v359, 128
  %v361 = vld [vmem:[%s2] sm:$0xff]
  %v362 = vld [vmem:[%s2 + $0x8] sm:$0xff]
  %v363 = vld [vmem:[%s2 + $0x10] sm:$0xff]
  %v364 = vld [vmem:[%s2 + $0x18] sm:$0xff]
  %v365 = vld [vmem:[%s2 + $0x20] sm:$0xff]
  %v366 = vld [vmem:[%s2 + $0x28] sm:$0xff]
  %v367 = vld [vmem:[%s2 + $0x30] sm:$0xff]
  %v368 = vld [vmem:[%s2 + $0x38] sm:$0xff]
  %v369 = vld [vmem:[%s2 + $0x40] sm:$0xff]
  %v370 = vld [vmem:[%s2 + $0x48] sm:$0xff]
  %v371 = vld [vmem:[%s2 + $0x50] sm:$0xff]
  %v372 = vld [vmem:[%s2 + $0x58] sm:$0xff]
  %v373 = vld [vmem:[%s2 + $0x60] sm:$0xff]
  %v374 = vld [vmem:[%s2 + $0x68] sm:$0xff]
  %v375 = vld [vmem:[%s2 + $0x70] sm:$0xff]
  %v376 = vld [vmem:[%s2 + $0x78] sm:$0xff]
  %377 = vset.pattern.permute.xlu0 0
  %378 = vperm.xlu0 %377, %v361
  %v379 = vpop.permute.xlu0 %378
  %380 = vset.pattern.permute.xlu0 0
  %381 = vperm.xlu0 %380, %v362
  %v382 = vpop.permute.xlu0 %381
  %383 = vset.pattern.permute.xlu0 0
  %384 = vperm.xlu0 %383, %v363
  %v385 = vpop.permute.xlu0 %384
  %386 = vset.pattern.permute.xlu0 0
  %387 = vperm.xlu0 %386, %v364
  %v388 = vpop.permute.xlu0 %387
  %389 = vset.pattern.permute.xlu0 0
  %390 = vperm.xlu0 %389, %v365
  %v391 = vpop.permute.xlu0 %390
  %392 = vset.pattern.permute.xlu0 0
  %393 = vperm.xlu0 %392, %v366
  %v394 = vpop.permute.xlu0 %393
  %395 = vset.pattern.permute.xlu0 0
  %396 = vperm.xlu0 %395, %v367
  %v397 = vpop.permute.xlu0 %396
  %398 = vset.pattern.permute.xlu0 0
  %399 = vperm.xlu0 %398, %v368
  %v400 = vpop.permute.xlu0 %399
  %401 = vset.pattern.permute.xlu0 0
  %402 = vperm.xlu0 %401, %v369
  %v403 = vpop.permute.xlu0 %402
  %404 = vset.pattern.permute.xlu0 0
  %405 = vperm.xlu0 %404, %v370
  %v406 = vpop.permute.xlu0 %405
  %407 = vset.pattern.permute.xlu0 0
  %408 = vperm.xlu0 %407, %v371
  %v409 = vpop.permute.xlu0 %408
  %410 = vset.pattern.permute.xlu0 0
  %411 = vperm.xlu0 %410, %v372
  %v412 = vpop.permute.xlu0 %411
  %413 = vset.pattern.permute.xlu0 0
  %414 = vperm.xlu0 %413, %v373
  %v415 = vpop.permute.xlu0 %414
  %416 = vset.pattern.permute.xlu0 0
  %417 = vperm.xlu0 %416, %v374
  %v418 = vpop.permute.xlu0 %417
  %419 = vset.pattern.permute.xlu0 0
  %420 = vperm.xlu0 %419, %v375
  %v421 = vpop.permute.xlu0 %420
  %422 = vset.pattern.permute.xlu0 0
  %423 = vperm.xlu0 %422, %v376
  %v424 = vpop.permute.xlu0 %423
  %vm425 = vcmp.eq.s32.totalorder %v359, %v379
  %vm426 = vcmp.eq.s32.totalorder %v360, %v379
  %vm427 = vcmp.eq.s32.totalorder %v359, %v382
  %vm428 = vcmp.eq.s32.totalorder %v360, %v382
  %vm429 = vcmp.eq.s32.totalorder %v359, %v385
  %vm430 = vcmp.eq.s32.totalorder %v360, %v385
  %vm431 = vcmp.eq.s32.totalorder %v359, %v388
  %vm432 = vcmp.eq.s32.totalorder %v360, %v388
  %vm433 = vcmp.eq.s32.totalorder %v359, %v391
  %vm434 = vcmp.eq.s32.totalorder %v360, %v391
  %vm435 = vcmp.eq.s32.totalorder %v359, %v394
  %vm436 = vcmp.eq.s32.totalorder %v360, %v394
  %vm437 = vcmp.eq.s32.totalorder %v359, %v397
  %vm438 = vcmp.eq.s32.totalorder %v360, %v397
  %vm439 = vcmp.eq.s32.totalorder %v359, %v400
  %vm440 = vcmp.eq.s32.totalorder %v360, %v400
  %vm441 = vcmp.eq.s32.totalorder %v359, %v403
  %vm442 = vcmp.eq.s32.totalorder %v360, %v403
  %vm443 = vcmp.eq.s32.totalorder %v359, %v406
  %vm444 = vcmp.eq.s32.totalorder %v360, %v406
  %vm445 = vcmp.eq.s32.totalorder %v359, %v409
  %vm446 = vcmp.eq.s32.totalorder %v360, %v409
  %vm447 = vcmp.eq.s32.totalorder %v359, %v412
  %vm448 = vcmp.eq.s32.totalorder %v360, %v412
  %vm449 = vcmp.eq.s32.totalorder %v359, %v415
  %vm450 = vcmp.eq.s32.totalorder %v360, %v415
  %vm451 = vcmp.eq.s32.totalorder %v359, %v418
  %vm452 = vcmp.eq.s32.totalorder %v360, %v418
  %vm453 = vcmp.eq.s32.totalorder %v359, %v421
  %vm454 = vcmp.eq.s32.totalorder %v360, %v421
  %vm455 = vcmp.eq.s32.totalorder %v359, %v424
  %vm456 = vcmp.eq.s32.totalorder %v360, %v424
  %v457 = vsel %vm425, 1.0, 0.0
  %v458 = vsel %vm426, 1.0, 0.0
  %v459 = vsel %vm427, 1.0, 0.0
  %v460 = vsel %vm428, 1.0, 0.0
  %v461 = vsel %vm429, 1.0, 0.0
  %v462 = vsel %vm430, 1.0, 0.0
  %v463 = vsel %vm431, 1.0, 0.0
  %v464 = vsel %vm432, 1.0, 0.0
  %v465 = vsel %vm433, 1.0, 0.0
  %v466 = vsel %vm434, 1.0, 0.0
  %v467 = vsel %vm435, 1.0, 0.0
  %v468 = vsel %vm436, 1.0, 0.0
  %v469 = vsel %vm437, 1.0, 0.0
  %v470 = vsel %vm438, 1.0, 0.0
  %v471 = vsel %vm439, 1.0, 0.0
  %v472 = vsel %vm440, 1.0, 0.0
  %v473 = vsel %vm441, 1.0, 0.0
  %v474 = vsel %vm442, 1.0, 0.0
  %v475 = vsel %vm443, 1.0, 0.0
  %v476 = vsel %vm444, 1.0, 0.0
  %v477 = vsel %vm445, 1.0, 0.0
  %v478 = vsel %vm446, 1.0, 0.0
  %v479 = vsel %vm447, 1.0, 0.0
  %v480 = vsel %vm448, 1.0, 0.0
  %v481 = vsel %vm449, 1.0, 0.0
  %v482 = vsel %vm450, 1.0, 0.0
  %v483 = vsel %vm451, 1.0, 0.0
  %v484 = vsel %vm452, 1.0, 0.0
  %v485 = vsel %vm453, 1.0, 0.0
  %v486 = vsel %vm454, 1.0, 0.0
  %v487 = vsel %vm455, 1.0, 0.0
  %v488 = vsel %vm456, 1.0, 0.0
  %v489 = vld [vmem:[%s1] sm:$0xf]
  %490 = vmatprep.subr.mxu0 %v458
  %491 = vmatpush1.msra.mxu0 %v457
  %492 = vmatprep.subr.mxu0 %v460
  %493 = vmatpush1.msra.mxu0 %v459
  %494 = vmatprep.subr.mxu0 %v462
  %495 = vmatpush1.msra.mxu0 %v461
  %496 = vmatprep.subr.mxu0 %v464
  %497 = vmatpush1.msra.mxu0 %v463
  %498 = vmatprep.subr.mxu0 %v466
  %499 = vmatpush1.msra.mxu0 %v465
  %500 = vmatprep.subr.mxu0 %v468
  %501 = vmatpush1.msra.mxu0 %v467
  %502 = vmatprep.subr.mxu0 %v470
  %503 = vmatpush1.msra.mxu0 %v469
  %504 = vmatprep.subr.mxu0 %v472
  %505 = vmatpush1.msra.mxu0 %v471
  %506 = vmatprep.subr.mxu0 %v474
  %507 = vmatpush1.msra.mxu0 %v473
  %508 = vmatprep.subr.mxu0 %v476
  %509 = vmatpush1.msra.mxu0 %v475
  %510 = vmatprep.subr.mxu0 %v478
  %511 = vmatpush1.msra.mxu0 %v477
  %512 = vmatprep.subr.mxu0 %v480
  %513 = vmatpush1.msra.mxu0 %v479
  %514 = vmatprep.subr.mxu0 %v482
  %515 = vmatpush1.msra.mxu0 %v481
  %516 = vmatprep.subr.mxu0 %v484
  %517 = vmatpush1.msra.mxu0 %v483
  %518 = vmatprep.subr.mxu0 %v486
  %519 = vmatpush1.msra.mxu0 %v485
  %520 = vmatprep.subr.mxu0 %v488
  %521 = vmatpush1.msra.mxu0 %v487
  %522 = vmatprep.subr.mxu0 0.0
  %523 = vmatpush1.msra.mxu0 0.0
  %524 = vmatprep.subr.mxu0 0.0
  %525 = vmatpush1.msra.mxu0 0.0
  %526 = vmatprep.subr.mxu0 0.0
  %527 = vmatpush1.msra.mxu0 0.0
  %528 = vmatprep.subr.mxu0 0.0
  %529 = vmatpush1.msra.mxu0 0.0
  %530 = vmatprep.subr.mxu0 0.0
  %531 = vmatpush1.msra.mxu0 0.0
  %532 = vmatprep.subr.mxu0 0.0
  %533 = vmatpush1.msra.mxu0 0.0
  %534 = vmatprep.subr.mxu0 0.0
  %535 = vmatpush1.msra.mxu0 0.0
  %536 = vmatprep.subr.mxu0 0.0
  %537 = vmatpush1.msra.mxu0 0.0
  %538 = vmatprep.subr.mxu0 0.0
  %539 = vmatpush1.msra.mxu0 0.0
  %540 = vmatprep.subr.mxu0 0.0
  %541 = vmatpush1.msra.mxu0 0.0
  %542 = vmatprep.subr.mxu0 0.0
  %543 = vmatpush1.msra.mxu0 0.0
  %544 = vmatprep.subr.mxu0 0.0
  %545 = vmatpush1.msra.mxu0 0.0
  %546 = vmatprep.subr.mxu0 0.0
  %547 = vmatpush1.msra.mxu0 0.0
  %548 = vmatprep.subr.mxu0 0.0
  %549 = vmatpush1.msra.mxu0 0.0
  %550 = vmatprep.subr.mxu0 0.0
  %551 = vmatpush1.msra.mxu0 0.0
  %552 = vmatprep.subr.mxu0 0.0
  %553 = vmatpush1.msra.mxu0 0.0
  %554 = vmatprep.mubr.f32.mxu0 0.0
  %555 = vmatmul.mubr.f32.gmra.mrb[0].mxu0 %v489
  %v556 = vpop.f32.mrb[0].mxu0
  %v557 = vadd.f32 0.0, %v556
  %v558 = vpop.f32.mrb[0].mxu0
  %v559 = vadd.f32 0.0, %v558
  %560 = vdwg.mxu0
  %v561 = vsel %vm55, %v557, 1.0
  %v562 = vsel %vm55, %v559, 1.0
  %vm563 = vcmask 39936
  %v565 = vsel %vm563, %v23, 0
  %v568 = vsel %vm563, %v24, 0
  %vm570 = vcmask 1044480
  %v572 = vsel %vm570, %v561, 0
  %v575 = vsel %vm570, %v562, 0
  %577 = vmatprep.subr.mxu0 %v575
  %578 = vmatpush1.msra.mxu0 %v572
  %579 = vmatprep.subr.mxu0 0.0
  %580 = vmatpush1.msra.mxu0 0.0
  %581 = vmatprep.subr.mxu0 0.0
  %582 = vmatpush1.msra.mxu0 0.0
  %583 = vmatprep.subr.mxu0 0.0
  %584 = vmatpush1.msra.mxu0 0.0
  %585 = vmatprep.subr.mxu0 0.0
  %586 = vmatpush1.msra.mxu0 0.0
  %587 = vmatprep.subr.mxu0 0.0
  %588 = vmatpush1.msra.mxu0 0.0
  %589 = vmatprep.subr.mxu0 0.0
  %590 = vmatpush1.msra.mxu0 0.0
  %591 = vmatprep.subr.mxu0 0.0
  %592 = vmatpush1.msra.mxu0 0.0
  %593 = vmatprep.subr.mxu0 0.0
  %594 = vmatpush1.msra.mxu0 0.0
  %595 = vmatprep.subr.mxu0 0.0
  %596 = vmatpush1.msra.mxu0 0.0
  %597 = vmatprep.subr.mxu0 0.0
  %598 = vmatpush1.msra.mxu0 0.0
  %599 = vmatprep.subr.mxu0 0.0
  %600 = vmatpush1.msra.mxu0 0.0
  %601 = vmatprep.subr.mxu0 0.0
  %602 = vmatpush1.msra.mxu0 0.0
  %603 = vmatprep.subr.mxu0 0.0
  %604 = vmatpush1.msra.mxu0 0.0
  %605 = vmatprep.subr.mxu0 0.0
  %606 = vmatpush1.msra.mxu0 0.0
  %607 = vmatprep.subr.mxu0 0.0
  %608 = vmatpush1.msra.mxu0 0.0
  %609 = vmatprep.subr.mxu0 0.0
  %610 = vmatpush1.msra.mxu0 0.0
  %611 = vmatprep.subr.mxu0 0.0
  %612 = vmatpush1.msra.mxu0 0.0
  %613 = vmatprep.subr.mxu0 0.0
  %614 = vmatpush1.msra.mxu0 0.0
  %615 = vmatprep.subr.mxu0 0.0
  %616 = vmatpush1.msra.mxu0 0.0
  %617 = vmatprep.subr.mxu0 0.0
  %618 = vmatpush1.msra.mxu0 0.0
  %619 = vmatprep.subr.mxu0 0.0
  %620 = vmatpush1.msra.mxu0 0.0
  %621 = vmatprep.subr.mxu0 0.0
  %622 = vmatpush1.msra.mxu0 0.0
  %623 = vmatprep.subr.mxu0 0.0
  %624 = vmatpush1.msra.mxu0 0.0
  %625 = vmatprep.subr.mxu0 0.0
  %626 = vmatpush1.msra.mxu0 0.0
  %627 = vmatprep.subr.mxu0 0.0
  %628 = vmatpush1.msra.mxu0 0.0
  %629 = vmatprep.subr.mxu0 0.0
  %630 = vmatpush1.msra.mxu0 0.0
  %631 = vmatprep.subr.mxu0 0.0
  %632 = vmatpush1.msra.mxu0 0.0
  %633 = vmatprep.subr.mxu0 0.0
  %634 = vmatpush1.msra.mxu0 0.0
  %635 = vmatprep.subr.mxu0 0.0
  %636 = vmatpush1.msra.mxu0 0.0
  %637 = vmatprep.subr.mxu0 0.0
  %638 = vmatpush1.msra.mxu0 0.0
  %639 = vmatprep.subr.mxu0 0.0
  %640 = vmatpush1.msra.mxu0 0.0
  %641 = vmatprep.mubr.f32.mxu0 0.0
  %642 = vmatmul.mubr.f32.gmra.mrb[0].mxu0 %v565
  %v643 = vpop.f32.mrb[0].mxu0
  %v644 = vadd.f32 0.0, %v643
  %v645 = vpop.f32.mrb[0].mxu0
  %v646 = vadd.f32 0.0, %v645
  %647 = vmatprep.mubr.f32.mxu0 0.0
  %648 = vmatmul.mubr.f32.gmra.mrb[0].mxu0 %v568
  %v649 = vpop.f32.mrb[0].mxu0
  %v650 = vadd.f32 0.0, %v649
  %v651 = vpop.f32.mrb[0].mxu0
  %v652 = vadd.f32 0.0, %v651
  %653 = vdwg.mxu0
  %v654 = vmax.f32 %v644, 0.0
  %v655 = vmax.f32 %v646, 0.0
  %v656 = vmax.f32 %v650, 0.0
  %v657 = vmax.f32 %v652, 0.0
  %v659 = vsel %vm266, %v25, 0
  %v662 = vsel %vm266, %v26, 0
  %v665 = vsel %vm266, %v27, 0
  %v668 = vsel %vm266, %v28, 0
  %v671 = vsel %vm266, %v29, 0
  %v674 = vsel %vm266, %v30, 0
  %v677 = vsel %vm266, %v31, 0
  %v680 = vsel %vm266, %v32, 0
  %682 = vmatprep.subr.mxu0 %v355
  %683 = vmatpush1.msra.mxu0 %v354
  %684 = vmatprep.subr.mxu0 %v357
  %685 = vmatpush1.msra.mxu0 %v356
  %686 = vmatprep.subr.mxu0 %v655
  %687 = vmatpush1.msra.mxu0 %v654
  %688 = vmatprep.subr.mxu0 %v657
  %689 = vmatpush1.msra.mxu0 %v656
  %690 = vmatprep.subr.mxu0 %v275
  %691 = vmatpush1.msra.mxu0 %v275
  %692 = vmatprep.subr.mxu0 0.0
  %693 = vmatpush1.msra.mxu0 0.0
  %694 = vmatprep.subr.mxu0 0.0
  %695 = vmatpush1.msra.mxu0 0.0
  %696 = vmatprep.subr.mxu0 0.0
  %697 = vmatpush1.msra.mxu0 0.0
  %698 = vmatprep.subr.mxu0 0.0
  %699 = vmatpush1.msra.mxu0 0.0
  %700 = vmatprep.subr.mxu0 0.0
  %701 = vmatpush1.msra.mxu0 0.0
  %702 = vmatprep.subr.mxu0 0.0
  %703 = vmatpush1.msra.mxu0 0.0
  %704 = vmatprep.subr.mxu0 0.0
  %705 = vmatpush1.msra.mxu0 0.0
  %706 = vmatprep.subr.mxu0 0.0
  %707 = vmatpush1.msra.mxu0 0.0
  %708 = vmatprep.subr.mxu0 0.0
  %709 = vmatpush1.msra.mxu0 0.0
  %710 = vmatprep.subr.mxu0 0.0
  %711 = vmatpush1.msra.mxu0 0.0
  %712 = vmatprep.subr.mxu0 0.0
  %713 = vmatpush1.msra.mxu0 0.0
  %714 = vmatprep.subr.mxu0 0.0
  %715 = vmatpush1.msra.mxu0 0.0
  %716 = vmatprep.subr.mxu0 0.0
  %717 = vmatpush1.msra.mxu0 0.0
  %718 = vmatprep.subr.mxu0 0.0
  %719 = vmatpush1.msra.mxu0 0.0
  %720 = vmatprep.subr.mxu0 0.0
  %721 = vmatpush1.msra.mxu0 0.0
  %722 = vmatprep.subr.mxu0 0.0
  %723 = vmatpush1.msra.mxu0 0.0
  %724 = vmatprep.subr.mxu0 0.0
  %725 = vmatpush1.msra.mxu0 0.0
  %726 = vmatprep.subr.mxu0 0.0
  %727 = vmatpush1.msra.mxu0 0.0
  %728 = vmatprep.subr.mxu0 0.0
  %729 = vmatpush1.msra.mxu0 0.0
  %730 = vmatprep.subr.mxu0 0.0
  %731 = vmatpush1.msra.mxu0 0.0
  %732 = vmatprep.subr.mxu0 0.0
  %733 = vmatpush1.msra.mxu0 0.0
  %734 = vmatprep.subr.mxu0 0.0
  %735 = vmatpush1.msra.mxu0 0.0
  %736 = vmatprep.subr.mxu0 0.0
  %737 = vmatpush1.msra.mxu0 0.0
  %738 = vmatprep.subr.mxu0 0.0
  %739 = vmatpush1.msra.mxu0 0.0
  %740 = vmatprep.subr.mxu0 0.0
  %741 = vmatpush1.msra.mxu0 0.0
  %742 = vmatprep.subr.mxu0 0.0
  %743 = vmatpush1.msra.mxu0 0.0
  %744 = vmatprep.subr.mxu0 0.0
  %745 = vmatpush1.msra.mxu0 0.0
  %746 = vmatprep.mubr.f32.mxu0 0.0
  %747 = vmatmul.mubr.f32.gmra.mrb[0].mxu0 %v659
  %v748 = vpop.f32.mrb[0].mxu0
  %v749 = vadd.f32 0.0, %v748
  %v750 = vpop.f32.mrb[0].mxu0
  %v751 = vadd.f32 0.0, %v750
  %752 = vmatprep.mubr.f32.mxu0 0.0
  %753 = vmatmul.mubr.f32.gmra.mrb[0].mxu0 %v662
  %v754 = vpop.f32.mrb[0].mxu0
  %v755 = vadd.f32 0.0, %v754
  %v756 = vpop.f32.mrb[0].mxu0
  %v757 = vadd.f32 0.0, %v756
  %758 = vmatprep.mubr.f32.mxu0 0.0
  %759 = vmatmul.mubr.f32.gmra.mrb[0].mxu0 %v665
  %v760 = vpop.f32.mrb[0].mxu0
  %v761 = vadd.f32 0.0, %v760
  %v762 = vpop.f32.mrb[0].mxu0
  %v763 = vadd.f32 0.0, %v762
  %764 = vmatprep.mubr.f32.mxu0 0.0
  %765 = vmatmul.mubr.f32.gmra.mrb[0].mxu0 %v668
  %v766 = vpop.f32.mrb[0].mxu0
  %v767 = vadd.f32 0.0, %v766
  %v768 = vpop.f32.mrb[0].mxu0
  %v769 = vadd.f32 0.0, %v768
  %770 = vmatprep.mubr.f32.mxu0 0.0
  %771 = vmatmul.mubr.f32.gmra.mrb[0].mxu0 %v671
  %v772 = vpop.f32.mrb[0].mxu0
  %v773 = vadd.f32 0.0, %v772
  %v774 = vpop.f32.mrb[0].mxu0
  %v775 = vadd.f32 0.0, %v774
  %776 = vmatprep.mubr.f32.mxu0 0.0
  %777 = vmatmul.mubr.f32.gmra.mrb[0].mxu0 %v674
  %v778 = vpop.f32.mrb[0].mxu0
  %v779 = vadd.f32 0.0, %v778
  %v780 = vpop.f32.mrb[0].mxu0
  %v781 = vadd.f32 0.0, %v780
  %782 = vmatprep.mubr.f32.mxu0 0.0
  %783 = vmatmul.mubr.f32.gmra.mrb[0].mxu0 %v677
  %v784 = vpop.f32.mrb[0].mxu0
  %v785 = vadd.f32 0.0, %v784
  %v786 = vpop.f32.mrb[0].mxu0
  %v787 = vadd.f32 0.0, %v786
  %788 = vmatprep.mubr.f32.mxu0 0.0
  %789 = vmatmul.mubr.f32.gmra.mrb[0].mxu0 %v680
  %v790 = vpop.f32.mrb[0].mxu0
  %v791 = vadd.f32 0.0, %v790
  %v792 = vpop.f32.mrb[0].mxu0
  %v793 = vadd.f32 0.0, %v792
  %794 = vdwg.mxu0
  %v795 = vmax.f32 %v749, 0.0
  %v796 = vmax.f32 %v751, 0.0
  %v797 = vmax.f32 %v755, 0.0
  %v798 = vmax.f32 %v757, 0.0
  %v799 = vmax.f32 %v761, 0.0
  %v800 = vmax.f32 %v763, 0.0
  %v801 = vmax.f32 %v767, 0.0
  %v802 = vmax.f32 %v769, 0.0
  %v803 = vmax.f32 %v773, 0.0
  %v804 = vmax.f32 %v775, 0.0
  %v805 = vmax.f32 %v779, 0.0
  %v806 = vmax.f32 %v781, 0.0
  %v807 = vmax.f32 %v785, 0.0
  %v808 = vmax.f32 %v787, 0.0
  %v809 = vmax.f32 %v791, 0.0
  %v810 = vmax.f32 %v793, 0.0
  %vm811 = vcmask 531456
  %v813 = vsel %vm811, %v33, 0
  %v816 = vsel %vm811, %v34, 0
  %v819 = vsel %vm811, %v35, 0
  %821 = vmatprep.subr.mxu0 %v796
  %822 = vmatpush1.msra.mxu0 %v795
  %823 = vmatprep.subr.mxu0 %v798
  %824 = vmatpush1.msra.mxu0 %v797
  %825 = vmatprep.subr.mxu0 %v800
  %826 = vmatpush1.msra.mxu0 %v799
  %827 = vmatprep.subr.mxu0 %v802
  %828 = vmatpush1.msra.mxu0 %v801
  %829 = vmatprep.subr.mxu0 %v804
  %830 = vmatpush1.msra.mxu0 %v803
  %831 = vmatprep.subr.mxu0 %v806
  %832 = vmatpush1.msra.mxu0 %v805
  %833 = vmatprep.subr.mxu0 %v808
  %834 = vmatpush1.msra.mxu0 %v807
  %835 = vmatprep.subr.mxu0 %v810
  %836 = vmatpush1.msra.mxu0 %v809
  %837 = vmatprep.subr.mxu0 %v275
  %838 = vmatpush1.msra.mxu0 %v275
  %839 = vmatprep.subr.mxu0 0.0
  %840 = vmatpush1.msra.mxu0 0.0
  %841 = vmatprep.subr.mxu0 0.0
  %842 = vmatpush1.msra.mxu0 0.0
  %843 = vmatprep.subr.mxu0 0.0
  %844 = vmatpush1.msra.mxu0 0.0
  %845 = vmatprep.subr.mxu0 0.0
  %846 = vmatpush1.msra.mxu0 0.0
  %847 = vmatprep.subr.mxu0 0.0
  %848 = vmatpush1.msra.mxu0 0.0
  %849 = vmatprep.subr.mxu0 0.0
  %850 = vmatpush1.msra.mxu0 0.0
  %851 = vmatprep.subr.mxu0 0.0
  %852 = vmatpush1.msra.mxu0 0.0
  %853 = vmatprep.subr.mxu0 0.0
  %854 = vmatpush1.msra.mxu0 0.0
  %855 = vmatprep.subr.mxu0 0.0
  %856 = vmatpush1.msra.mxu0 0.0
  %857 = vmatprep.subr.mxu0 0.0
  %858 = vmatpush1.msra.mxu0 0.0
  %859 = vmatprep.subr.mxu0 0.0
  %860 = vmatpush1.msra.mxu0 0.0
  %861 = vmatprep.subr.mxu0 0.0
  %862 = vmatpush1.msra.mxu0 0.0
  %863 = vmatprep.subr.mxu0 0.0
  %864 = vmatpush1.msra.mxu0 0.0
  %865 = vmatprep.subr.mxu0 0.0
  %866 = vmatpush1.msra.mxu0 0.0
  %867 = vmatprep.subr.mxu0 0.0
  %868 = vmatpush1.msra.mxu0 0.0
  %869 = vmatprep.subr.mxu0 0.0
  %870 = vmatpush1.msra.mxu0 0.0
  %871 = vmatprep.subr.mxu0 0.0
  %872 = vmatpush1.msra.mxu0 0.0
  %873 = vmatprep.subr.mxu0 0.0
  %874 = vmatpush1.msra.mxu0 0.0
  %875 = vmatprep.subr.mxu0 0.0
  %876 = vmatpush1.msra.mxu0 0.0
  %877 = vmatprep.subr.mxu0 0.0
  %878 = vmatpush1.msra.mxu0 0.0
  %879 = vmatprep.subr.mxu0 0.0
  %880 = vmatpush1.msra.mxu0 0.0
  %881 = vmatprep.subr.mxu0 0.0
  %882 = vmatpush1.msra.mxu0 0.0
  %883 = vmatprep.subr.mxu0 0.0
  %884 = vmatpush1.msra.mxu0 0.0
  %885 = vmatprep.mubr.f32.mxu0 0.0
  %886 = vmatmul.mubr.f32.gmra.mrb[0].mxu0 %v813
  %v887 = vpop.f32.mrb[0].mxu0
  %v888 = vadd.f32 0.0, %v887
  %v889 = vpop.f32.mrb[0].mxu0
  %v890 = vadd.f32 0.0, %v889
  %891 = vmatprep.mubr.f32.mxu0 0.0
  %892 = vmatmul.mubr.f32.gmra.mrb[0].mxu0 %v816
  %v893 = vpop.f32.mrb[0].mxu0
  %v894 = vadd.f32 0.0, %v893
  %v895 = vpop.f32.mrb[0].mxu0
  %v896 = vadd.f32 0.0, %v895
  %897 = vmatprep.mubr.f32.mxu0 0.0
  %898 = vmatmul.mubr.f32.gmra.mrb[0].mxu0 %v819
  %v899 = vpop.f32.mrb[0].mxu0
  %v900 = vadd.f32 0.0, %v899
  %v901 = vpop.f32.mrb[0].mxu0
  %v902 = vadd.f32 0.0, %v901
  %903 = vdwg.mxu0
  %904 = vst [vmem:[%s4] sm:$0xff] %v888
  %905 = vst [vmem:[%s4 + $0x8] sm:$0xff] %v890
  %906 = vst [vmem:[%s4 + $0x10] sm:$0xff] %v894
  %907 = vst [vmem:[%s4 + $0x18] sm:$0xff] %v896
  %908 = vst [vmem:[%s4 + $0x20] sm:$0xff] %v900
  %909 = vst [vmem:[%s4 + $0x28] sm:$0xff] %v902
  // Predicated region
  $region18: #{bevfusion_forward.1} parent=0 // pred_check
    _
  $region19: #{bevfusion_forward.1} parent=0 // pred_check_branch
    %911 = sbr.rel (0) target = $region21
  $region20: #{bevfusion_forward.1} parent=0 // pred_region
    _
  $region21: #{bevfusion_forward.1} parent=0 // pred_fallthru
    _
  // Predicated region
  $region22: #{bevfusion_forward.1} parent=0 // pred_check
    _
  $region23: #{bevfusion_forward.1} parent=0 // pred_check_branch
    %913 = sbr.rel (0) target = $region25
  $region24: #{bevfusion_forward.1} parent=0 // pred_region
    _
  $region25: #{bevfusion_forward.1} parent=0 // pred_fallthru
    _

</llo_original>
